<compile_context>
chip_gen: v6e
topology: v6e:2x2x1
jax: 0.10.0
libtpu: 0.0.40
codegen_flags: <defaults>
</compile_context>

<pallas_src>
import functools

import jax
import jax.numpy as jnp
from jax.experimental import pallas as pl
from jax.experimental.pallas import tpu as pltpu

LEAKY_SLOPE = 0.01    # nn.LeakyReLU default
BN_EPS = 1e-5         # nn.BatchNorm1d default

_LANE = 128           # lane width
_BF16_SUBLANE = 16    # bf16 rows per sublane-packed vreg


def _leaky_relu(y):
    # one vmax per vreg instead of compare+select
    return jnp.maximum(y, LEAKY_SLOPE * y)


def _round_up(x, m):
    return (x + m - 1) // m * m


def _tpu_generation():
    """(multi_tc, wide_mxu): v7x has 2 TensorCores/chip; v6e/v7x have 2x256x256 MXUs."""
    try:
        kind = jax.devices()[0].device_kind.lower()
    except Exception:
        kind = ""
    multi_tc = "v7" in kind
    wide_mxu = multi_tc or ("v6" in kind)
    return multi_tc, wide_mxu


def _largest_tile(d_pad, cap):
    """Largest multiple of 128 that divides d_pad and is <= cap."""
    t = min(cap, d_pad)
    t -= t % _LANE
    t = max(t, _LANE)
    while t > _LANE and d_pad % t != 0:
        t -= _LANE
    return t


def _pick_tile_n(d_pad, multi_tc):
    if multi_tc and d_pad >= 2 * _LANE:
        # at least two feature tiles so the "parallel" grid axis spans both TCs
        return _largest_tile(d_pad, d_pad // 2)
    # single TC: fewest grid steps / biggest DMA chunks that stay VMEM-sane
    return _largest_tile(d_pad, d_pad if d_pad <= 512 else 512)


def _vmem_bytes(n_pad, d_pad, tile_n):
    resident = (n_pad * d_pad * 2        # x bf16 (single-buffered)
                + d_pad * d_pad * 2      # W1 bf16 (single-buffered)
                + 2 * d_pad * 4          # gamma1/beta1
                + n_pad * d_pad * 2)     # layer-1 activation scratch (bf16)
    streamed = (3 * d_pad * tile_n * 2   # W2 stripes (<=3 buffers)
                + 2 * 2 * tile_n * 4     # gamma2/beta2 (2 buffers)
                + 2 * n_pad * tile_n * 4)  # f32 output tile (2 buffers)
    l1_temp = 2 * n_pad * d_pad * 4      # f32 temporaries of the layer-1 pass
    return resident + streamed + l1_temp


# ---------------------------------------------------------------------------
# Fused kernel: layer 1 (Linear -> BN -> LeakyReLU) at inner grid step 0 into
# a VMEM scratch; layer 2 streamed one output-feature stripe per grid step.
# BN statistics are per-feature over the full (true) batch, so feature tiling
# of layer 2 is BN-safe.
# ---------------------------------------------------------------------------
def _fused_kernel(x_ref, w1_ref, gb1_ref, w2_ref, gb2_ref, o_ref, h_ref, *, n_valid):
    inv_n = 1.0 / float(n_valid)
    n_pad = x_ref.shape[0]
    rows = jax.lax.broadcasted_iota(jnp.int32, (n_pad, 1), 0)
    valid = (rows < n_valid).astype(jnp.float32)            # [N_pad, 1]

    # ---- layer 1: full feature width, computed once per core (the scratch
    # persists across the inner "arbitrary" axis; it is recomputed at the
    # start of each outer "parallel" step so each v7x TensorCore fills its own
    # private copy). ----
    @pl.when(pl.program_id(1) == 0)
    def _():
        y = jnp.dot(x_ref[...], w1_ref[...],
                    preferred_element_type=jnp.float32)      # [N_pad, D] f32
        # padded batch rows of y are exactly zero (zero x rows, bias folded
        # away into the BN mean subtraction) -> plain column sums are exact.
        mean = jnp.sum(y, axis=0, keepdims=True) * inv_n
        diff = (y - mean) * valid                            # centered, padded rows masked
        var = jnp.sum(diff * diff, axis=0, keepdims=True) * inv_n
        inv = jax.lax.rsqrt(var + BN_EPS)
        gb = gb1_ref[...]
        h = _leaky_relu(diff * (inv * gb[0:1, :]) + gb[1:2, :])
        # re-zero the padded batch rows so layer-2 batch statistics stay exact
        h_ref[...] = (h * valid).astype(h_ref.dtype)

    # ---- layer 2: one output-feature stripe ----
    y = jnp.dot(h_ref[...], w2_ref[0],
                preferred_element_type=jnp.float32)          # [N_pad, T] f32
    mean = jnp.sum(y, axis=0, keepdims=True) * inv_n         # padded rows of y are zero
    diff = y - mean
    dm = diff * valid
    var = jnp.sum(dm * dm, axis=0, keepdims=True) * inv_n
    inv = jax.lax.rsqrt(var + BN_EPS)
    gb = gb2_ref[...]
    # no padded-row re-zero here: the wrapper slices the output to [:n, :d]
    o_ref[...] = _leaky_relu(diff * (inv * gb[0:1, :]) + gb[1:2, :]).astype(o_ref.dtype)


def _run_fused(x_p, w1_p, gb1, w2_blk, gb2, *, n_valid, n_pad, d_pad, tile_n,
               n_outer, n_inner, vmem_limit, use_hints):
    n_tiles = n_outer * n_inner

    def spec(shape, index_map, buffers=None):
        if use_hints and buffers is not None:
            return pl.BlockSpec(shape, index_map, pipeline_mode=pl.Buffered(buffers))
        return pl.BlockSpec(shape, index_map)

    w2_buffers = 3 if n_tiles >= 3 else None

    grid_spec = pltpu.PrefetchScalarGridSpec(
        num_scalar_prefetch=0,
        grid=(n_outer, n_inner),
        in_specs=[
            spec((n_pad, d_pad), lambda c, j: (0, 0), buffers=1),          # x (resident)
            spec((d_pad, d_pad), lambda c, j: (0, 0), buffers=1),          # W1 (resident)
            spec((2, d_pad), lambda c, j: (0, 0), buffers=1),              # gamma1/beta1
            spec((1, d_pad, tile_n),                                        # W2 stripe:
                 lambda c, j: (c * n_inner + j, 0, 0),                      # contiguous pre-blocked slab
                 buffers=w2_buffers),
            spec((2, tile_n), lambda c, j: (0, c * n_inner + j)),          # gamma2/beta2
        ],
        out_specs=pl.BlockSpec((n_pad, tile_n), lambda c, j: (0, c * n_inner + j)),
        scratch_shapes=[pltpu.VMEM((n_pad, d_pad), jnp.bfloat16)],         # layer-1 activation
    )

    kernel = functools.partial(_fused_kernel, n_valid=n_valid)
    return pl.pallas_call(
        kernel,
        out_shape=jax.ShapeDtypeStruct((n_pad, d_pad), jnp.float32),
        grid_spec=grid_spec,
        compiler_params=pltpu.CompilerParams(
            dimension_semantics=("parallel", "arbitrary"),
            vmem_limit_bytes=vmem_limit,
        ),
    )(x_p, w1_p, gb1, w2_blk, gb2)


def linear_block(x, params):
    """x: [N, D] float32.  params: dict of parameters (see init_params)."""
    n, d = x.shape
    multi_tc, wide_mxu = _tpu_generation()
    feat_align = 256 if wide_mxu else _LANE       # fill the 2x256x256 MXU on v6e/v7x
    n_pad = _round_up(max(n, 8), _BF16_SUBLANE)
    d_pad = _round_up(d, feat_align)

    def pad2(a, rows, cols, dtype):
        return jnp.pad(
            a, ((0, rows - a.shape[0]), (0, cols - a.shape[1]))).astype(dtype)

    x_p = pad2(x, n_pad, d_pad, jnp.bfloat16)
    w1_p = pad2(params["w1"], d_pad, d_pad, jnp.bfloat16)
    w2_p = pad2(params["w2"], d_pad, d_pad, jnp.bfloat16)
    # gamma/beta merged into a single (2, d_pad) operand per layer; zero-padding
    # keeps the padded feature columns of the intermediate activation exactly 0.
    gb1 = jnp.concatenate([pad2(params["g1"], 1, d_pad, jnp.float32),
                           pad2(params["be1"], 1, d_pad, jnp.float32)], axis=0)
    gb2 = jnp.concatenate([pad2(params["g2"], 1, d_pad, jnp.float32),
                           pad2(params["be2"], 1, d_pad, jnp.float32)], axis=0)
    # NOTE: b1/b2 are intentionally not passed to the kernel: training-mode BN
    # subtracts the batch mean, which removes a per-feature bias exactly.

    # Per-generation tile selection + VMEM budget.
    tile_n = _pick_tile_n(d_pad, multi_tc)
    cap = (44 << 20) if multi_tc else (100 << 20)   # v7x: 64 MiB/TC; v5e/v6e: 128 MiB
    while tile_n > _LANE and _vmem_bytes(n_pad, d_pad, tile_n) > cap:
        tile_n = _largest_tile(d_pad, tile_n - _LANE)
    # TODO(synk): add a batch-tiled (two-pass BN) variant for very large N where
    # the resident x / layer-1 activation blocks alone exceed v7x's 64 MiB/TC.
    vmem_limit = int(min(cap, max(8 << 20, 2 * _vmem_bytes(n_pad, d_pad, tile_n))))

    n_tiles = d_pad // tile_n
    n_outer = 2 if (multi_tc and n_tiles >= 2 and n_tiles % 2 == 0) else 1
    n_inner = n_tiles // n_outer

    # Pre-block W2 so each grid step's weight stripe is one contiguous DMA slab.
    w2_blk = w2_p.reshape(d_pad, n_tiles, tile_n).transpose(1, 0, 2)

    kwargs = dict(n_valid=n, n_pad=n_pad, d_pad=d_pad, tile_n=tile_n,
                  n_outer=n_outer, n_inner=n_inner, vmem_limit=vmem_limit)
    try:
        out = _run_fused(x_p, w1_p, gb1, w2_blk, gb2, use_hints=True, **kwargs)
    except Exception:
        # pipeline_mode hints (Buffered(1)/(3)) are advisory; fall back to the
        # default double-buffered pipeline if this Pallas build rejects them.
        out = _run_fused(x_p, w1_p, gb1, w2_blk, gb2, use_hints=False, **kwargs)
    return out[:n, :d]


# ---------------------------------------------------------------------------
# Parameter init + references
# ---------------------------------------------------------------------------
def init_params(key, d):
    """nn.Linear(d, d) weight stored transposed to (in, out); BN gamma=1, beta=0."""
    k1, k2, k3, k4 = jax.random.split(key, 4)
    bound = 1.0 / jnp.sqrt(d)
    w1 = jax.random.uniform(k1, (d, d), jnp.float32, -bound, bound)   # (in, out)
    b1 = jax.random.uniform(k2, (1, d), jnp.float32, -bound, bound)
    w2 = jax.random.uniform(k3, (d, d), jnp.float32, -bound, bound)
    b2 = jax.random.uniform(k4, (1, d), jnp.float32, -bound, bound)
    return dict(
        w1=w1, b1=b1, g1=jnp.ones((1, d), jnp.float32), be1=jnp.zeros((1, d), jnp.float32),
        w2=w2, b2=b2, g2=jnp.ones((1, d), jnp.float32), be2=jnp.zeros((1, d), jnp.float32),
    )


def reference(x, p):
    """Pure-JAX f32 reference reproducing the PyTorch forward (training-mode BN,
    biases included — they cancel against the BN mean)."""
    def bn(y, g, b):
        m = jnp.mean(y, axis=0, keepdims=True)
        v = jnp.mean((y - m) ** 2, axis=0, keepdims=True)
        return (y - m) / jnp.sqrt(v + BN_EPS) * g + b

    y = x @ p["w1"] + p["b1"]
    y = _leaky_relu(bn(y, p["g1"], p["be1"]))
    y = y @ p["w2"] + p["b2"]
    y = _leaky_relu(bn(y, p["g2"], p["be2"]))
    return y


def reference_bf16_inputs(x, p):
    """Reference mimicking the kernel's numerics (bf16 MXU inputs, f32 acc,
    bias folded away, centered variance) for a tight-tolerance check."""
    def bn(y, g, b):
        m = jnp.mean(y, axis=0, keepdims=True)
        v = jnp.mean((y - m) ** 2, axis=0, keepdims=True)
        return (y - m) * jax.lax.rsqrt(v + BN_EPS) * g + b

    w1 = p["w1"].astype(jnp.bfloat16)
    w2 = p["w2"].astype(jnp.bfloat16)
    y = jnp.dot(x.astype(jnp.bfloat16), w1, preferred_element_type=jnp.float32)
    y = _leaky_relu(bn(y, p["g1"], p["be1"]))
    y = jnp.dot(y.astype(jnp.bfloat16), w2, preferred_element_type=jnp.float32)
    y = _leaky_relu(bn(y, p["g2"], p["be2"]))
    return y


if __name__ == "__main__":
    key = jax.random.PRNGKey(0)
    kx, kp = jax.random.split(key)

    batch, linear_size = 8, 32
    x = jax.random.normal(kx, (batch, linear_size), jnp.float32)
    params = init_params(kp, linear_size)

    out = jax.block_until_ready(linear_block(x, params))
    assert out.shape == (batch, linear_size)

    # Tight check against a reference with identical (bf16-in / f32-acc) numerics.
    ref_bf16 = reference_bf16_inputs(x, params)
    assert jnp.allclose(out, ref_bf16, atol=2e-3, rtol=2e-3), (
        "kernel mismatch vs bf16-numerics reference: max abs diff "
        f"{float(jnp.max(jnp.abs(out - ref_bf16))):.3e}")

    # Looser check against the exact PyTorch-semantics f32 reference
    # (difference is only bf16 MXU-input rounding).
    ref_f32 = reference(x, params)
    assert jnp.allclose(out, ref_f32, atol=5e-2, rtol=5e-2), (
        "kernel mismatch vs f32 PyTorch-semantics reference: max abs diff "
        f"{float(jnp.max(jnp.abs(out - ref_f32))):.3e}")

    print("KERNEL_OK")
</pallas_src>

<mosaic_0001>
module attributes {stable_mosaic.version = 11 : i64} {
  func.func @_fused_kernel(%arg0: i32, %arg1: i32, %arg2: memref<16x128xbf16, #tpu.memory_space<vmem>>, %arg3: memref<128x128xbf16, #tpu.memory_space<vmem>>, %arg4: memref<2x128xf32, #tpu.memory_space<vmem>>, %arg5: memref<1x128x128xbf16, #tpu.memory_space<vmem>>, %arg6: memref<2x128xf32, #tpu.memory_space<vmem>>, %arg7: memref<16x128xf32, #tpu.memory_space<vmem>>, %arg8: memref<16x128xbf16, #tpu.memory_space<vmem>>) attributes {dimension_semantics = [#tpu.dimension_semantics<parallel>, #tpu.dimension_semantics<arbitrary>], iteration_bounds = array<i64: 1, 1>, scalar_prefetch = 0 : i64, scratch_operands = 1 : i64, tpu.core_type = #tpu.core_type<tc>, window_params = [{pipeline_mode = #tpu.pipeline_mode<synchronous>, transform_indices = @transform_0, window_bounds = array<i64: 16, 128>}, {pipeline_mode = #tpu.pipeline_mode<synchronous>, transform_indices = @transform_1, window_bounds = array<i64: 128, 128>}, {pipeline_mode = #tpu.pipeline_mode<synchronous>, transform_indices = @transform_2, window_bounds = array<i64: 2, 128>}, {transform_indices = @transform_3, window_bounds = array<i64: 1, 128, 128>}, {transform_indices = @transform_4, window_bounds = array<i64: 2, 128>}, {transform_indices = @transform_5, window_bounds = array<i64: 16, 128>}]} {
    %0 = tpu.iota {dimensions = array<i32: 0>} : vector<16x1xi32>
    %c8_i32 = arith.constant 8 : i32
    %1 = vector.broadcast %c8_i32 : i32 to vector<16x1xi32>
    %2 = arith.cmpi slt, %0, %1 : vector<16x1xi32>
    %3 = arith.extui %2 : vector<16x1xi1> to vector<16x1xi32>
    %4 = arith.sitofp %3 : vector<16x1xi32> to vector<16x1xf32>
    %c0_i32 = arith.constant 0 : i32
    %5 = arith.cmpi eq, %arg1, %c0_i32 : i32
    %6 = arith.extui %5 : i1 to i32
    %c0_i32_0 = arith.constant 0 : i32
    %7 = arith.cmpi ne, %6, %c0_i32_0 : i32
    scf.if %7 {
      %c0_15 = arith.constant 0 : index
      %c0_16 = arith.constant 0 : index
      %40 = vector.load %arg2[%c0_15, %c0_16] : memref<16x128xbf16, #tpu.memory_space<vmem>>, vector<16x128xbf16>
      %c0_17 = arith.constant 0 : index
      %c0_18 = arith.constant 0 : index
      %41 = vector.load %arg3[%c0_17, %c0_18] : memref<128x128xbf16, #tpu.memory_space<vmem>>, vector<128x128xbf16>
      %cst_19 = arith.constant dense<0.000000e+00> : vector<16x128xf32>
      %42 = tpu.matmul %40, %41, %cst_19 {dimension_numbers = #tpu.dot_dimension_numbers<[1], [0], [0], [1], [0, 0, 1, 1], [], []>} : vector<16x128xbf16>, vector<128x128xbf16>, vector<16x128xf32> -> vector<16x128xf32>
      %cst_20 = arith.constant dense<0.000000e+00> : vector<128xf32>
      %43 = vector.multi_reduction <add>, %42, %cst_20 [0] : vector<16x128xf32> to vector<128xf32>
      %44 = vector.shape_cast %43 : vector<128xf32> to vector<1x128xf32>
      %cst_21 = arith.constant 1.250000e-01 : f32
      %45 = vector.broadcast %cst_21 : f32 to vector<1x128xf32>
      %46 = arith.mulf %44, %45 : vector<1x128xf32>
      %47 = vector.broadcast %46 : vector<1x128xf32> to vector<16x128xf32>
      %48 = arith.subf %42, %47 : vector<16x128xf32>
      %49 = vector.broadcast %4 : vector<16x1xf32> to vector<16x128xf32>
      %50 = arith.mulf %48, %49 : vector<16x128xf32>
      %51 = arith.mulf %50, %50 : vector<16x128xf32>
      %cst_22 = arith.constant dense<0.000000e+00> : vector<128xf32>
      %52 = vector.multi_reduction <add>, %51, %cst_22 [0] : vector<16x128xf32> to vector<128xf32>
      %53 = vector.shape_cast %52 : vector<128xf32> to vector<1x128xf32>
      %cst_23 = arith.constant 1.250000e-01 : f32
      %54 = vector.broadcast %cst_23 : f32 to vector<1x128xf32>
      %55 = arith.mulf %53, %54 : vector<1x128xf32>
      %cst_24 = arith.constant 9.99999974E-6 : f32
      %56 = vector.broadcast %cst_24 : f32 to vector<1x128xf32>
      %57 = arith.addf %55, %56 : vector<1x128xf32>
      %58 = math.rsqrt %57 : vector<1x128xf32>
      %c0_25 = arith.constant 0 : index
      %c0_26 = arith.constant 0 : index
      %59 = vector.load %arg4[%c0_25, %c0_26] : memref<2x128xf32, #tpu.memory_space<vmem>>, vector<2x128xf32>
      %60 = vector.extract_strided_slice %59 {offsets = [0, 0], sizes = [1, 128], strides = [1, 1]} : vector<2x128xf32> to vector<1x128xf32>
      %61 = arith.mulf %58, %60 : vector<1x128xf32>
      %62 = vector.broadcast %61 : vector<1x128xf32> to vector<16x128xf32>
      %63 = arith.mulf %50, %62 : vector<16x128xf32>
      %64 = vector.extract_strided_slice %59 {offsets = [1, 0], sizes = [1, 128], strides = [1, 1]} : vector<2x128xf32> to vector<1x128xf32>
      %65 = vector.broadcast %64 : vector<1x128xf32> to vector<16x128xf32>
      %66 = arith.addf %63, %65 : vector<16x128xf32>
      %cst_27 = arith.constant 0.00999999977 : f32
      %67 = vector.broadcast %cst_27 : f32 to vector<16x128xf32>
      %68 = arith.mulf %67, %66 : vector<16x128xf32>
      %69 = arith.maximumf %66, %68 : vector<16x128xf32>
      %70 = vector.broadcast %4 : vector<16x1xf32> to vector<16x128xf32>
      %71 = arith.mulf %69, %70 : vector<16x128xf32>
      %72 = arith.truncf %71 : vector<16x128xf32> to vector<16x128xbf16>
      %c0_28 = arith.constant 0 : index
      %c0_29 = arith.constant 0 : index
      %73 = vector.load %arg8[%c0_28, %c0_29] : memref<16x128xbf16, #tpu.memory_space<vmem>>, vector<16x128xbf16>
      tpu.vector_store %arg8[%c0_28, %c0_29], %72 {strides = array<i32>} : memref<16x128xbf16, #tpu.memory_space<vmem>>, vector<16x128xbf16>,
    } else {
    }
    %c0 = arith.constant 0 : index
    %c0_1 = arith.constant 0 : index
    %8 = vector.load %arg8[%c0, %c0_1] : memref<16x128xbf16, #tpu.memory_space<vmem>>, vector<16x128xbf16>
    %c0_2 = arith.constant 0 : index
    %c0_3 = arith.constant 0 : index
    %c0_4 = arith.constant 0 : index
    %9 = vector.load %arg5[%c0_2, %c0_3, %c0_4] : memref<1x128x128xbf16, #tpu.memory_space<vmem>>, vector<1x128x128xbf16>
    %10 = vector.shape_cast %9 : vector<1x128x128xbf16> to vector<128x128xbf16>
    %cst = arith.constant dense<0.000000e+00> : vector<16x128xf32>
    %11 = tpu.matmul %8, %10, %cst {dimension_numbers = #tpu.dot_dimension_numbers<[1], [0], [0], [1], [0, 0, 1, 1], [], []>} : vector<16x128xbf16>, vector<128x128xbf16>, vector<16x128xf32> -> vector<16x128xf32>
    %cst_5 = arith.constant dense<0.000000e+00> : vector<128xf32>
    %12 = vector.multi_reduction <add>, %11, %cst_5 [0] : vector<16x128xf32> to vector<128xf32>
    %13 = vector.shape_cast %12 : vector<128xf32> to vector<1x128xf32>
    %cst_6 = arith.constant 1.250000e-01 : f32
    %14 = vector.broadcast %cst_6 : f32 to vector<1x128xf32>
    %15 = arith.mulf %13, %14 : vector<1x128xf32>
    %16 = vector.broadcast %15 : vector<1x128xf32> to vector<16x128xf32>
    %17 = arith.subf %11, %16 : vector<16x128xf32>
    %18 = vector.broadcast %4 : vector<16x1xf32> to vector<16x128xf32>
    %19 = arith.mulf %17, %18 : vector<16x128xf32>
    %20 = arith.mulf %19, %19 : vector<16x128xf32>
    %cst_7 = arith.constant dense<0.000000e+00> : vector<128xf32>
    %21 = vector.multi_reduction <add>, %20, %cst_7 [0] : vector<16x128xf32> to vector<128xf32>
    %22 = vector.shape_cast %21 : vector<128xf32> to vector<1x128xf32>
    %cst_8 = arith.constant 1.250000e-01 : f32
    %23 = vector.broadcast %cst_8 : f32 to vector<1x128xf32>
    %24 = arith.mulf %22, %23 : vector<1x128xf32>
    %cst_9 = arith.constant 9.99999974E-6 : f32
    %25 = vector.broadcast %cst_9 : f32 to vector<1x128xf32>
    %26 = arith.addf %24, %25 : vector<1x128xf32>
    %27 = math.rsqrt %26 : vector<1x128xf32>
    %c0_10 = arith.constant 0 : index
    %c0_11 = arith.constant 0 : index
    %28 = vector.load %arg6[%c0_10, %c0_11] : memref<2x128xf32, #tpu.memory_space<vmem>>, vector<2x128xf32>
    %29 = vector.extract_strided_slice %28 {offsets = [0, 0], sizes = [1, 128], strides = [1, 1]} : vector<2x128xf32> to vector<1x128xf32>
    %30 = arith.mulf %27, %29 : vector<1x128xf32>
    %31 = vector.broadcast %30 : vector<1x128xf32> to vector<16x128xf32>
    %32 = arith.mulf %17, %31 : vector<16x128xf32>
    %33 = vector.extract_strided_slice %28 {offsets = [1, 0], sizes = [1, 128], strides = [1, 1]} : vector<2x128xf32> to vector<1x128xf32>
    %34 = vector.broadcast %33 : vector<1x128xf32> to vector<16x128xf32>
    %35 = arith.addf %32, %34 : vector<16x128xf32>
    %cst_12 = arith.constant 0.00999999977 : f32
    %36 = vector.broadcast %cst_12 : f32 to vector<16x128xf32>
    %37 = arith.mulf %36, %35 : vector<16x128xf32>
    %38 = arith.maximumf %35, %37 : vector<16x128xf32>
    %c0_13 = arith.constant 0 : index
    %c0_14 = arith.constant 0 : index
    %39 = vector.load %arg7[%c0_13, %c0_14] : memref<16x128xf32, #tpu.memory_space<vmem>>, vector<16x128xf32>
    tpu.vector_store %arg7[%c0_13, %c0_14], %38 {strides = array<i32>} : memref<16x128xf32, #tpu.memory_space<vmem>>, vector<16x128xf32>,
    return
  }
  func.func @transform_0(%arg0: i32, %arg1: i32) -> (i32, i32) {
    %c0_i32 = arith.constant 0 : i32
    %c0_i32_0 = arith.constant 0 : i32
    %c0_i32_1 = arith.constant 0 : i32
    return %c0_i32, %c0_i32_0 : i32, i32
  }
  func.func @transform_1(%arg0: i32, %arg1: i32) -> (i32, i32) {
    %c0_i32 = arith.constant 0 : i32
    %c0_i32_0 = arith.constant 0 : i32
    %c0_i32_1 = arith.constant 0 : i32
    return %c0_i32, %c0_i32_0 : i32, i32
  }
  func.func @transform_2(%arg0: i32, %arg1: i32) -> (i32, i32) {
    %c0_i32 = arith.constant 0 : i32
    %c0_i32_0 = arith.constant 0 : i32
    %c0_i32_1 = arith.constant 0 : i32
    return %c0_i32, %c0_i32_0 : i32, i32
  }
  func.func @transform_3(%arg0: i32, %arg1: i32) -> (i32, i32, i32) {
    %c1_i32 = arith.constant 1 : i32
    %0 = arith.muli %arg0, %c1_i32 : i32
    %1 = arith.addi %0, %arg1 : i32
    %c0_i32 = arith.constant 0 : i32
    %c0_i32_0 = arith.constant 0 : i32
    %c0_i32_1 = arith.constant 0 : i32
    return %1, %c0_i32, %c0_i32_0 : i32, i32, i32
  }
  func.func @transform_4(%arg0: i32, %arg1: i32) -> (i32, i32) {
    %c1_i32 = arith.constant 1 : i32
    %0 = arith.muli %arg0, %c1_i32 : i32
    %1 = arith.addi %0, %arg1 : i32
    %c0_i32 = arith.constant 0 : i32
    %c0_i32_0 = arith.constant 0 : i32
    return %c0_i32, %1 : i32, i32
  }
  func.func @transform_5(%arg0: i32, %arg1: i32) -> (i32, i32) {
    %c1_i32 = arith.constant 1 : i32
    %0 = arith.muli %arg0, %c1_i32 : i32
    %1 = arith.addi %0, %arg1 : i32
    %c0_i32 = arith.constant 0 : i32
    %c0_i32_0 = arith.constant 0 : i32
    return %c0_i32, %1 : i32, i32
  }
}

module attributes {stable_mosaic.version = 11 : i64} {
  func.func @_fused_kernel(%arg0: i32, %arg1: i32, %arg2: memref<16x128xbf16, #tpu.memory_space<vmem>>, %arg3: memref<128x128xbf16, #tpu.memory_space<vmem>>, %arg4: memref<2x128xf32, #tpu.memory_space<vmem>>, %arg5: memref<1x128x128xbf16, #tpu.memory_space<vmem>>, %arg6: memref<2x128xf32, #tpu.memory_space<vmem>>, %arg7: memref<16x128xf32, #tpu.memory_space<vmem>>, %arg8: memref<16x128xbf16, #tpu.memory_space<vmem>>) attributes {dimension_semantics = [#tpu.dimension_semantics<parallel>, #tpu.dimension_semantics<arbitrary>], iteration_bounds = array<i64: 1, 1>, scalar_prefetch = 0 : i64, scratch_operands = 1 : i64, tpu.core_type = #tpu.core_type<tc>, window_params = [{pipeline_mode = #tpu.pipeline_mode<synchronous>, transform_indices = @transform_0, window_bounds = array<i64: 16, 128>}, {pipeline_mode = #tpu.pipeline_mode<synchronous>, transform_indices = @transform_1, window_bounds = array<i64: 128, 128>}, {pipeline_mode = #tpu.pipeline_mode<synchronous>, transform_indices = @transform_2, window_bounds = array<i64: 2, 128>}, {transform_indices = @transform_3, window_bounds = array<i64: 1, 128, 128>}, {transform_indices = @transform_4, window_bounds = array<i64: 2, 128>}, {transform_indices = @transform_5, window_bounds = array<i64: 16, 128>}]} {
    %0 = tpu.iota {dimensions = array<i32: 0>} : vector<16x1xi32>
    %c8_i32 = arith.constant 8 : i32
    %1 = vector.broadcast %c8_i32 : i32 to vector<16x1xi32>
    %2 = arith.cmpi slt, %0, %1 : vector<16x1xi32>
    %3 = arith.extui %2 : vector<16x1xi1> to vector<16x1xi32>
    %4 = arith.sitofp %3 : vector<16x1xi32> to vector<16x1xf32>
    %c0_i32 = arith.constant 0 : i32
    %5 = arith.cmpi eq, %arg1, %c0_i32 : i32
    %6 = arith.extui %5 : i1 to i32
    %c0_i32_0 = arith.constant 0 : i32
    %7 = arith.cmpi ne, %6, %c0_i32_0 : i32
    scf.if %7 {
      %c0_15 = arith.constant 0 : index
      %c0_16 = arith.constant 0 : index
      %40 = vector.load %arg2[%c0_15, %c0_16] : memref<16x128xbf16, #tpu.memory_space<vmem>>, vector<16x128xbf16>
      %c0_17 = arith.constant 0 : index
      %c0_18 = arith.constant 0 : index
      %41 = vector.load %arg3[%c0_17, %c0_18] : memref<128x128xbf16, #tpu.memory_space<vmem>>, vector<128x128xbf16>
      %cst_19 = arith.constant dense<0.000000e+00> : vector<16x128xf32>
      %42 = tpu.matmul %40, %41, %cst_19 {dimension_numbers = #tpu.dot_dimension_numbers<[1], [0], [0], [1], [0, 0, 1, 1], [], []>} : vector<16x128xbf16>, vector<128x128xbf16>, vector<16x128xf32> -> vector<16x128xf32>
      %cst_20 = arith.constant dense<0.000000e+00> : vector<128xf32>
      %43 = vector.multi_reduction <add>, %42, %cst_20 [0] : vector<16x128xf32> to vector<128xf32>
      %44 = vector.shape_cast %43 : vector<128xf32> to vector<1x128xf32>
      %cst_21 = arith.constant 1.250000e-01 : f32
      %45 = vector.broadcast %cst_21 : f32 to vector<1x128xf32>
      %46 = arith.mulf %44, %45 : vector<1x128xf32>
      %47 = vector.broadcast %46 : vector<1x128xf32> to vector<16x128xf32>
      %48 = arith.subf %42, %47 : vector<16x128xf32>
      %49 = vector.broadcast %4 : vector<16x1xf32> to vector<16x128xf32>
      %50 = arith.mulf %48, %49 : vector<16x128xf32>
      %51 = arith.mulf %50, %50 : vector<16x128xf32>
      %cst_22 = arith.constant dense<0.000000e+00> : vector<128xf32>
      %52 = vector.multi_reduction <add>, %51, %cst_22 [0] : vector<16x128xf32> to vector<128xf32>
      %53 = vector.shape_cast %52 : vector<128xf32> to vector<1x128xf32>
      %cst_23 = arith.constant 1.250000e-01 : f32
      %54 = vector.broadcast %cst_23 : f32 to vector<1x128xf32>
      %55 = arith.mulf %53, %54 : vector<1x128xf32>
      %cst_24 = arith.constant 9.99999974E-6 : f32
      %56 = vector.broadcast %cst_24 : f32 to vector<1x128xf32>
      %57 = arith.addf %55, %56 : vector<1x128xf32>
      %58 = math.rsqrt %57 : vector<1x128xf32>
      %c0_25 = arith.constant 0 : index
      %c0_26 = arith.constant 0 : index
      %59 = vector.load %arg4[%c0_25, %c0_26] : memref<2x128xf32, #tpu.memory_space<vmem>>, vector<2x128xf32>
      %60 = vector.extract_strided_slice %59 {offsets = [0, 0], sizes = [1, 128], strides = [1, 1]} : vector<2x128xf32> to vector<1x128xf32>
      %61 = arith.mulf %58, %60 : vector<1x128xf32>
      %62 = vector.broadcast %61 : vector<1x128xf32> to vector<16x128xf32>
      %63 = arith.mulf %50, %62 : vector<16x128xf32>
      %64 = vector.extract_strided_slice %59 {offsets = [1, 0], sizes = [1, 128], strides = [1, 1]} : vector<2x128xf32> to vector<1x128xf32>
      %65 = vector.broadcast %64 : vector<1x128xf32> to vector<16x128xf32>
      %66 = arith.addf %63, %65 : vector<16x128xf32>
      %cst_27 = arith.constant 0.00999999977 : f32
      %67 = vector.broadcast %cst_27 : f32 to vector<16x128xf32>
      %68 = arith.mulf %67, %66 : vector<16x128xf32>
      %69 = arith.maximumf %66, %68 : vector<16x128xf32>
      %70 = vector.broadcast %4 : vector<16x1xf32> to vector<16x128xf32>
      %71 = arith.mulf %69, %70 : vector<16x128xf32>
      %72 = arith.truncf %71 : vector<16x128xf32> to vector<16x128xbf16>
      %c0_28 = arith.constant 0 : index
      %c0_29 = arith.constant 0 : index
      %73 = vector.load %arg8[%c0_28, %c0_29] : memref<16x128xbf16, #tpu.memory_space<vmem>>, vector<16x128xbf16>
      tpu.vector_store %arg8[%c0_28, %c0_29], %72 {strides = array<i32>} : memref<16x128xbf16, #tpu.memory_space<vmem>>, vector<16x128xbf16>,
    } else {
    }
    %c0 = arith.constant 0 : index
    %c0_1 = arith.constant 0 : index
    %8 = vector.load %arg8[%c0, %c0_1] : memref<16x128xbf16, #tpu.memory_space<vmem>>, vector<16x128xbf16>
    %c0_2 = arith.constant 0 : index
    %c0_3 = arith.constant 0 : index
    %c0_4 = arith.constant 0 : index
    %9 = vector.load %arg5[%c0_2, %c0_3, %c0_4] : memref<1x128x128xbf16, #tpu.memory_space<vmem>>, vector<1x128x128xbf16>
    %10 = vector.shape_cast %9 : vector<1x128x128xbf16> to vector<128x128xbf16>
    %cst = arith.constant dense<0.000000e+00> : vector<16x128xf32>
    %11 = tpu.matmul %8, %10, %cst {dimension_numbers = #tpu.dot_dimension_numbers<[1], [0], [0], [1], [0, 0, 1, 1], [], []>} : vector<16x128xbf16>, vector<128x128xbf16>, vector<16x128xf32> -> vector<16x128xf32>
    %cst_5 = arith.constant dense<0.000000e+00> : vector<128xf32>
    %12 = vector.multi_reduction <add>, %11, %cst_5 [0] : vector<16x128xf32> to vector<128xf32>
    %13 = vector.shape_cast %12 : vector<128xf32> to vector<1x128xf32>
    %cst_6 = arith.constant 1.250000e-01 : f32
    %14 = vector.broadcast %cst_6 : f32 to vector<1x128xf32>
    %15 = arith.mulf %13, %14 : vector<1x128xf32>
    %16 = vector.broadcast %15 : vector<1x128xf32> to vector<16x128xf32>
    %17 = arith.subf %11, %16 : vector<16x128xf32>
    %18 = vector.broadcast %4 : vector<16x1xf32> to vector<16x128xf32>
    %19 = arith.mulf %17, %18 : vector<16x128xf32>
    %20 = arith.mulf %19, %19 : vector<16x128xf32>
    %cst_7 = arith.constant dense<0.000000e+00> : vector<128xf32>
    %21 = vector.multi_reduction <add>, %20, %cst_7 [0] : vector<16x128xf32> to vector<128xf32>
    %22 = vector.shape_cast %21 : vector<128xf32> to vector<1x128xf32>
    %cst_8 = arith.constant 1.250000e-01 : f32
    %23 = vector.broadcast %cst_8 : f32 to vector<1x128xf32>
    %24 = arith.mulf %22, %23 : vector<1x128xf32>
    %cst_9 = arith.constant 9.99999974E-6 : f32
    %25 = vector.broadcast %cst_9 : f32 to vector<1x128xf32>
    %26 = arith.addf %24, %25 : vector<1x128xf32>
    %27 = math.rsqrt %26 : vector<1x128xf32>
    %c0_10 = arith.constant 0 : index
    %c0_11 = arith.constant 0 : index
    %28 = vector.load %arg6[%c0_10, %c0_11] : memref<2x128xf32, #tpu.memory_space<vmem>>, vector<2x128xf32>
    %29 = vector.extract_strided_slice %28 {offsets = [0, 0], sizes = [1, 128], strides = [1, 1]} : vector<2x128xf32> to vector<1x128xf32>
    %30 = arith.mulf %27, %29 : vector<1x128xf32>
    %31 = vector.broadcast %30 : vector<1x128xf32> to vector<16x128xf32>
    %32 = arith.mulf %17, %31 : vector<16x128xf32>
    %33 = vector.extract_strided_slice %28 {offsets = [1, 0], sizes = [1, 128], strides = [1, 1]} : vector<2x128xf32> to vector<1x128xf32>
    %34 = vector.broadcast %33 : vector<1x128xf32> to vector<16x128xf32>
    %35 = arith.addf %32, %34 : vector<16x128xf32>
    %cst_12 = arith.constant 0.00999999977 : f32
    %36 = vector.broadcast %cst_12 : f32 to vector<16x128xf32>
    %37 = arith.mulf %36, %35 : vector<16x128xf32>
    %38 = arith.maximumf %35, %37 : vector<16x128xf32>
    %c0_13 = arith.constant 0 : index
    %c0_14 = arith.constant 0 : index
    %39 = vector.load %arg7[%c0_13, %c0_14] : memref<16x128xf32, #tpu.memory_space<vmem>>, vector<16x128xf32>
    tpu.vector_store %arg7[%c0_13, %c0_14], %38 {strides = array<i32>} : memref<16x128xf32, #tpu.memory_space<vmem>>, vector<16x128xf32>,
    return
  }
  func.func @transform_0(%arg0: i32, %arg1: i32) -> (i32, i32) {
    %c0_i32 = arith.constant 0 : i32
    %c0_i32_0 = arith.constant 0 : i32
    %c0_i32_1 = arith.constant 0 : i32
    return %c0_i32, %c0_i32_0 : i32, i32
  }
  func.func @transform_1(%arg0: i32, %arg1: i32) -> (i32, i32) {
    %c0_i32 = arith.constant 0 : i32
    %c0_i32_0 = arith.constant 0 : i32
    %c0_i32_1 = arith.constant 0 : i32
    return %c0_i32, %c0_i32_0 : i32, i32
  }
  func.func @transform_2(%arg0: i32, %arg1: i32) -> (i32, i32) {
    %c0_i32 = arith.constant 0 : i32
    %c0_i32_0 = arith.constant 0 : i32
    %c0_i32_1 = arith.constant 0 : i32
    return %c0_i32, %c0_i32_0 : i32, i32
  }
  func.func @transform_3(%arg0: i32, %arg1: i32) -> (i32, i32, i32) {
    %c1_i32 = arith.constant 1 : i32
    %0 = arith.muli %arg0, %c1_i32 : i32
    %1 = arith.addi %0, %arg1 : i32
    %c0_i32 = arith.constant 0 : i32
    %c0_i32_0 = arith.constant 0 : i32
    %c0_i32_1 = arith.constant 0 : i32
    return %1, %c0_i32, %c0_i32_0 : i32, i32, i32
  }
  func.func @transform_4(%arg0: i32, %arg1: i32) -> (i32, i32) {
    %c1_i32 = arith.constant 1 : i32
    %0 = arith.muli %arg0, %c1_i32 : i32
    %1 = arith.addi %0, %arg1 : i32
    %c0_i32 = arith.constant 0 : i32
    %c0_i32_0 = arith.constant 0 : i32
    return %c0_i32, %1 : i32, i32
  }
  func.func @transform_5(%arg0: i32, %arg1: i32) -> (i32, i32) {
    %c1_i32 = arith.constant 1 : i32
    %0 = arith.muli %arg0, %c1_i32 : i32
    %1 = arith.addi %0, %arg1 : i32
    %c0_i32 = arith.constant 0 : i32
    %c0_i32_0 = arith.constant 0 : i32
    return %c0_i32, %1 : i32, i32
  }
}

</mosaic_0001>

<llo_original>
// kernel: tpu_custom_call.1
$region0: #{tpu_custom_call.1}
  #allocation0 [shape = 'u32[]', space=smem, size = 0x4, offset = 0x4, fixed_abs, tag = 'smem constant byte address 0x4 - core index']
  #allocation1 [shape = 'u32[144,128]{1,0:T(1,128)}', space=vmem, size = 0x12000, scoped, tag = 'internal scratch']
  #allocation2 [shape = 'bf16[16,128]{1,0:T(8,128)(2,1)}', space=vmem, size = 0x1000, scoped, tag = 'scratch operand']
  %s0 = inlined_call_operand.hbm [shape: bf16[16,128], index: 0, kind: input, shape index: {}]
  %s1 = inlined_call_operand.hbm [shape: bf16[128,128], index: 1, kind: input, shape index: {}]
  %s2 = inlined_call_operand.vmem [shape: f32[2,128], index: 2, kind: input, shape index: {}]
  %s3 = inlined_call_operand.hbm [shape: bf16[1,128,128], index: 3, kind: input, shape index: {}]
  %s4 = inlined_call_operand.vmem [shape: f32[2,128], index: 4, kind: input, shape index: {}]
  %s5 = inlined_call_operand.hbm [shape: f32[16,128], index: 5, kind: output, shape index: {}]
  %s6 = sld [smem:[#allocation0]]
  $region46: #{tpu_custom_call.1} parent=0
    _
  %s8 = ssub.s32 1, %s6
  %s9 = scalar_select 0, %s8, %s6
  $region1: #{tpu_custom_call.1} parent=0
    #allocation3 [shape = 'u8[4096]{0}', space=vmem, size = 0x1000, scoped, tag = 'input window, operand 0, single buffered']
    #allocation4 [shape = 's32[1]{0}', space=sflag, size = 0x4, scoped, tag = 'scoped memory for tpu_custom_call.1']
    #allocation5 [shape = 's32[1]{0}', space=sflag, size = 0x4, scoped, tag = 'scoped memory for tpu_custom_call.1']
    #allocation6 [shape = 'u8[32768]{0}', space=vmem, size = 0x8000, scoped, tag = 'input window, operand 1, single buffered']
    #allocation7 [shape = 's32[1]{0}', space=sflag, size = 0x4, scoped, tag = 'scoped memory for tpu_custom_call.1']
    #allocation8 [shape = 'u8[32768]{0}', space=vmem, size = 0x8000, scoped, tag = 'input window, operand 3, single buffered']
    #allocation9 [shape = 'u8[8192]{0}', space=vmem, size = 0x2000, scoped, tag = 'output window, operand 0, single buffered']
    %10 = vsyncpa [#allocation4], 0
    %11 = vsyncpa [#allocation7], 0
    %12 = vsyncpa [#allocation5], 0
    // Predicated region
    $region2: #{tpu_custom_call.1} parent=1 // pred_check
      _
    $region3: #{tpu_custom_call.1} parent=1 // pred_check_branch
      %14 = sbr.rel (0) target = $region5
    $region4: #{tpu_custom_call.1} parent=1 // pred_region
      %s16 = ssub.s32 128, 128
      %17 = vsyncadd [#allocation4], %s16
      %s18 = sshll.u32 [#allocation3], 4
      %s19 = int_to_ptr.vmem [resolvable:$true] %s18
      %24 = dma.hbm_to_vmem [thread:$0]  %s0, 128, %s19, [#allocation4], 64, 64, 4
    $region5: #{tpu_custom_call.1} parent=1 // pred_fallthru
      _
    // Predicated region
    $region6: #{tpu_custom_call.1} parent=1 // pred_check
      _
    $region7: #{tpu_custom_call.1} parent=1 // pred_check_branch
      %26 = sbr.rel (0) target = $region9
    $region8: #{tpu_custom_call.1} parent=1 // pred_region
      %s28 = ssub.s32 1024, 1024
      %29 = vsyncadd [#allocation7], %s28
      %s30 = sshll.u32 [#allocation6], 4
      %s31 = int_to_ptr.vmem [resolvable:$true] %s30
      %36 = dma.hbm_to_vmem [thread:$0]  %s1, 1024, %s31, [#allocation7], 64, 64, 4
    $region9: #{tpu_custom_call.1} parent=1 // pred_fallthru
      _
    // Predicated region
    $region10: #{tpu_custom_call.1} parent=1 // pred_check
      _
    $region11: #{tpu_custom_call.1} parent=1 // pred_check_branch
      %38 = sbr.rel (0) target = $region13
    $region12: #{tpu_custom_call.1} parent=1 // pred_region
      _
    $region13: #{tpu_custom_call.1} parent=1 // pred_fallthru
      _
    // Predicated region
    $region14: #{tpu_custom_call.1} parent=1 // pred_check
      _
    $region15: #{tpu_custom_call.1} parent=1 // pred_check_branch
      %40 = sbr.rel (0) target = $region17
    $region16: #{tpu_custom_call.1} parent=1 // pred_region
      %s41 = sadd.s32 0, 0
      %s43 = ssub.s32 1024, 1024
      %44 = vsyncadd [#allocation7], %s43
      %s45 = smul.addr %s41, 16
      %s46 = smul.addr %s45, 64
      %s47 = scalar_lea.hbm %s3, %s46
      %s48 = sshll.u32 [#allocation8], 4
      %s49 = int_to_ptr.vmem [resolvable:$true] %s48
      %54 = dma.hbm_to_vmem [thread:$0]  %s47, 1024, %s49, [#allocation7], 64, 64, 4
    $region17: #{tpu_custom_call.1} parent=1 // pred_fallthru
      _
    // Predicated region
    $region18: #{tpu_custom_call.1} parent=1 // pred_check
      _
    $region19: #{tpu_custom_call.1} parent=1 // pred_check_branch
      %56 = sbr.rel (0) target = $region21
    $region20: #{tpu_custom_call.1} parent=1 // pred_region
      %s57 = sadd.s32 0, 0
      %p58 = scmp.lt.s32.totalorder %s57, 0
      %s59 = scalar_select %p58, %s57, 0
      %s60 = smul.addr %s59, 2
      %s61 = scalar_lea.vmem %s4, %s60
      %s62 = sadd.s32 0, 0
    $region21: #{tpu_custom_call.1} parent=1 // pred_fallthru
      _
    // Predicated region
    $region22: #{tpu_custom_call.1} parent=1 // pred_check
      _
    $region23: #{tpu_custom_call.1} parent=1 // pred_check_branch
      %64 = sbr.rel (0) target = $region25
    $region24: #{tpu_custom_call.1} parent=1 // pred_region
      %65 = dma.done [#allocation4], 128
    $region25: #{tpu_custom_call.1} parent=1 // pred_fallthru
      _
    // Predicated region
    $region26: #{tpu_custom_call.1} parent=1 // pred_check
      _
    $region27: #{tpu_custom_call.1} parent=1 // pred_check_branch
      %67 = sbr.rel (0) target = $region29
    $region28: #{tpu_custom_call.1} parent=1 // pred_region
      %68 = dma.done [#allocation7], 1024
    $region29: #{tpu_custom_call.1} parent=1 // pred_fallthru
      _
    // Predicated region
    $region30: #{tpu_custom_call.1} parent=1 // pred_check
      _
    $region31: #{tpu_custom_call.1} parent=1 // pred_check_branch
      %70 = sbr.rel (0) target = $region33
    $region32: #{tpu_custom_call.1} parent=1 // pred_region
      %71 = dma.done [#allocation7], 1024
    $region33: #{tpu_custom_call.1} parent=1 // pred_fallthru
      _
    %s72 = sadd.s32 0, 0
    %p73 = scmp.lt.s32.totalorder %s72, 0
    %s74 = scalar_select %p73, %s72, 0
    %s75 = smul.addr %s74, 2
    %s76 = scalar_lea.vmem %s4, %s75
    %s77 = sadd.s32 0, 0
    %s78 = sadd.s32 0, 0
    %p79 = scmp.lt.s32.totalorder %s78, 0
    %s80 = scalar_select %p79, %s78, 0
    %s81 = smul.addr %s80, 2
    %s82 = scalar_lea.vmem %s4, %s81
    %s83 = sadd.s32 0, 0
    %s84 = sadd.s32 0, 0
    %v86 = vlaneseq
    %v87 = vshrl.u32 %v86, 7
    %v88 = vadd.s32 %v87, 8
    %vm89 = vcmp.lt.s32.totalorder %v87, 8
    %vm90 = vcmp.lt.s32.totalorder %v88, 8
    %v91 = vsel %vm89, 1, 0
    %v92 = vsel %vm90, 1, 0
    %v93 = vcvt.s32.f32 %v91
    %v94 = vcvt.s32.f32 %v92
    %p95 = scmp.eq.s32.totalorder 0, 0
    // Predicated region
    $region34: #{tpu_custom_call.1} parent=1 // pred_check
      %p96 = pneg %p95
    $region35: #{tpu_custom_call.1} parent=1 // pred_check_branch
      %98 = sbr.rel (%p96) target = $region37
    $region36: #{tpu_custom_call.1} parent=1 // pred_region
      %v99 = vld [vmem:[#allocation3] sm:$0xf]
      %v100 = vld [vmem:[#allocation3 + $0x4] sm:$0xf]
      %v101 = vld [vmem:[#allocation6] sm:$0xf]
      %v102 = vld [vmem:[#allocation6 + $0x4] sm:$0xf]
      %v103 = vld [vmem:[#allocation6 + $0x8] sm:$0xf]
      %v104 = vld [vmem:[#allocation6 + $0xc] sm:$0xf]
      %v105 = vld [vmem:[#allocation6 + $0x10] sm:$0xf]
      %v106 = vld [vmem:[#allocation6 + $0x14] sm:$0xf]
      %v107 = vld [vmem:[#allocation6 + $0x18] sm:$0xf]
      %v108 = vld [vmem:[#allocation6 + $0x1c] sm:$0xf]
      %v109 = vld [vmem:[#allocation6 + $0x20] sm:$0xf]
      %v110 = vld [vmem:[#allocation6 + $0x24] sm:$0xf]
      %v111 = vld [vmem:[#allocation6 + $0x28] sm:$0xf]
      %v112 = vld [vmem:[#allocation6 + $0x2c] sm:$0xf]
      %v113 = vld [vmem:[#allocation6 + $0x30] sm:$0xf]
      %v114 = vld [vmem:[#allocation6 + $0x34] sm:$0xf]
      %v115 = vld [vmem:[#allocation6 + $0x38] sm:$0xf]
      %v116 = vld [vmem:[#allocation6 + $0x3c] sm:$0xf]
      %v119 = vunpack.c.l.b16 %v99
      %v120 = vunpack.c.l.b16 %v100
      %v121 = vpack.c.b16 %v120, %v119
      %v139 = vunpack.c.l.b16 %v101
      %v140 = vunpack.c.l.b16 %v102
      %v141 = vunpack.c.l.b16 %v103
      %v142 = vunpack.c.l.b16 %v104
      %v143 = vunpack.c.l.b16 %v105
      %v144 = vunpack.c.l.b16 %v106
      %v145 = vunpack.c.l.b16 %v107
      %v146 = vunpack.c.l.b16 %v108
      %v147 = vunpack.c.l.b16 %v109
      %v148 = vunpack.c.l.b16 %v110
      %v149 = vunpack.c.l.b16 %v111
      %v150 = vunpack.c.l.b16 %v112
      %v151 = vunpack.c.l.b16 %v113
      %v152 = vunpack.c.l.b16 %v114
      %v153 = vunpack.c.l.b16 %v115
      %v154 = vunpack.c.l.b16 %v116
      %v155 = vpack.c.b16 %v140, %v139
      %v156 = vpack.c.b16 %v142, %v141
      %v157 = vpack.c.b16 %v144, %v143
      %v158 = vpack.c.b16 %v146, %v145
      %v159 = vpack.c.b16 %v148, %v147
      %v160 = vpack.c.b16 %v150, %v149
      %v161 = vpack.c.b16 %v152, %v151
      %v162 = vpack.c.b16 %v154, %v153
      %171 = vmatprep.subr.bf16.mxu0 0
      %172 = vmatpush1.bf16.msra.mxu0 %v162
      %173 = vmatprep.subr.bf16.mxu0 0
      %174 = vmatpush1.bf16.msra.mxu0 %v161
      %175 = vmatprep.subr.bf16.mxu0 0
      %176 = vmatpush1.bf16.msra.mxu0 %v160
      %177 = vmatprep.subr.bf16.mxu0 0
      %178 = vmatpush1.bf16.msra.mxu0 %v159
      %179 = vmatprep.subr.bf16.mxu0 0
      %180 = vmatpush1.bf16.msra.mxu0 %v158
      %181 = vmatprep.subr.bf16.mxu0 0
      %182 = vmatpush1.bf16.msra.mxu0 %v157
      %183 = vmatprep.subr.bf16.mxu0 0
      %184 = vmatpush1.bf16.msra.mxu0 %v156
      %185 = vmatprep.subr.bf16.mxu0 0
      %186 = vmatpush1.bf16.msra.mxu0 %v155
      %187 = vmatprep.subr.bf16.mxu0 0
      %188 = vmatpush2.bf16.msra.mxu0 0
      %189 = vmatprep.subr.bf16.mxu0 0
      %190 = vmatpush2.bf16.msra.mxu0 0
      %191 = vmatprep.subr.bf16.mxu0 0
      %192 = vmatpush2.bf16.msra.mxu0 0
      %193 = vmatprep.subr.bf16.mxu0 0
      %194 = vmatpush2.bf16.msra.mxu0 0
      %195 = vmatprep.subr.bf16.mxu0 0
      %196 = vmatpush2.bf16.msra.mxu0 0
      %197 = vmatprep.subr.bf16.mxu0 0
      %198 = vmatpush2.bf16.msra.mxu0 0
      %199 = vmatprep.subr.bf16.mxu0 0
      %200 = vmatpush2.bf16.msra.mxu0 0
      %201 = vmatprep.subr.bf16.mxu0 0
      %202 = vmatpush2.bf16.msra.mxu0 0
      %203 = vmatprep.mubr.bf16.mxu0 0
      %204 = vmatmul.mubr.bf16.gmra.mxu0 %v121
      %v205 = vpop.f32.mrf.mxu0
      %v206 = vadd.f32 0.0, %v205
      %v207 = vpop.f32.mrf.mxu0
      %v208 = vpop.f32.mrf.mxu0
      %v209 = vadd.f32 0.0, %v208
      %v210 = vpop.f32.mrf.mxu0
      %211 = vdwg.mxu0
      %v212 = vadd.f32 %v206, %v209
      %v213 = vrot.slane %v212, 4
      %v214 = vadd.f32 %v212, %v213
      %v215 = vrot.slane %v214, 2
      %v216 = vadd.f32 %v214, %v215
      %v217 = vrot.slane %v216, 1
      %v218 = vadd.f32 %v216, %v217
      %v219 = vmul.f32 %v218, 0.125
      %v220 = vsub.f32 %v206, %v219
      %v221 = vsub.f32 %v209, %v219
      %v222 = vmul.f32 %v220, %v93
      %v223 = vmul.f32 %v221, %v94
      %v224 = vmul.f32 %v222, %v222
      %v225 = vmul.f32 %v223, %v223
      %v226 = vadd.f32 %v224, %v225
      %v227 = vrot.slane %v226, 4
      %v228 = vadd.f32 %v226, %v227
      %v229 = vrot.slane %v228, 2
      %v230 = vadd.f32 %v228, %v229
      %v231 = vrot.slane %v230, 1
      %v232 = vadd.f32 %v230, %v231
      %v233 = vmul.f32 %v232, 0.125
      %v234 = vadd.f32 %v233, 1e-05
      %v235 = vrsqrt.pop %v234
      %v236 = vld [vmem:[%s2] sm:$0x3]
      %v237 = vmul.f32 %v235, %v236
      %v238 = vlaneseq
      %v239 = vshrl.u32 %v238, 7
      %v240 = vsub.s32 0, %v239
      %v241 = vrot.slane %v237, %v240
      %v242 = vmul.f32 %v222, %v241
      %v243 = vmul.f32 %v223, %v241
      %v244 = vlaneseq
      %v245 = vshrl.u32 %v244, 7
      %v246 = vsub.s32 1, %v245
      %v247 = vrot.slane %v236, %v246
      %v248 = vadd.f32 %v242, %v247
      %v249 = vadd.f32 %v243, %v247
      %v250 = vmul.f32 %v248, 0.01
      %v251 = vmul.f32 %v249, 0.01
      %v252 = vmax.f32 %v248, %v250
      %v253 = vmax.f32 %v249, %v251
      %v254 = vmul.f32 %v252, %v93
      %v255 = vmul.f32 %v253, %v94
      %v256 = vpack.c.bf16 %v255, %v254
      %v258 = vunpack.c.l.b16 %v256
      %v259 = vunpack.c.h.b16 %v256
      %v260 = vpack.c.b16 %v258, %v258
      %v261 = vpack.c.b16 %v259, %v259
      %264 = vst [vmem:[#allocation2] sm:$0xf] %v260
      %265 = vst [vmem:[#allocation2 + $0x4] sm:$0xf] %v261
    $region37: #{tpu_custom_call.1} parent=1 // pred_fallthru
      _
    %v266 = vld [vmem:[#allocation2] sm:$0xf]
    %v267 = vld [vmem:[#allocation2 + $0x4] sm:$0xf]
    %v268 = vld [vmem:[#allocation8] sm:$0xf]
    %v269 = vld [vmem:[#allocation8 + $0x4] sm:$0xf]
    %v270 = vld [vmem:[#allocation8 + $0x8] sm:$0xf]
    %v271 = vld [vmem:[#allocation8 + $0xc] sm:$0xf]
    %v272 = vld [vmem:[#allocation8 + $0x10] sm:$0xf]
    %v273 = vld [vmem:[#allocation8 + $0x14] sm:$0xf]
    %v274 = vld [vmem:[#allocation8 + $0x18] sm:$0xf]
    %v275 = vld [vmem:[#allocation8 + $0x1c] sm:$0xf]
    %v276 = vld [vmem:[#allocation8 + $0x20] sm:$0xf]
    %v277 = vld [vmem:[#allocation8 + $0x24] sm:$0xf]
    %v278 = vld [vmem:[#allocation8 + $0x28] sm:$0xf]
    %v279 = vld [vmem:[#allocation8 + $0x2c] sm:$0xf]
    %v280 = vld [vmem:[#allocation8 + $0x30] sm:$0xf]
    %v281 = vld [vmem:[#allocation8 + $0x34] sm:$0xf]
    %v282 = vld [vmem:[#allocation8 + $0x38] sm:$0xf]
    %v283 = vld [vmem:[#allocation8 + $0x3c] sm:$0xf]
    %v286 = vunpack.c.l.b16 %v266
    %v287 = vunpack.c.l.b16 %v267
    %v288 = vpack.c.b16 %v287, %v286
    %v306 = vunpack.c.l.b16 %v268
    %v307 = vunpack.c.l.b16 %v269
    %v308 = vunpack.c.l.b16 %v270
    %v309 = vunpack.c.l.b16 %v271
    %v310 = vunpack.c.l.b16 %v272
    %v311 = vunpack.c.l.b16 %v273
    %v312 = vunpack.c.l.b16 %v274
    %v313 = vunpack.c.l.b16 %v275
    %v314 = vunpack.c.l.b16 %v276
    %v315 = vunpack.c.l.b16 %v277
    %v316 = vunpack.c.l.b16 %v278
    %v317 = vunpack.c.l.b16 %v279
    %v318 = vunpack.c.l.b16 %v280
    %v319 = vunpack.c.l.b16 %v281
    %v320 = vunpack.c.l.b16 %v282
    %v321 = vunpack.c.l.b16 %v283
    %v322 = vpack.c.b16 %v307, %v306
    %v323 = vpack.c.b16 %v309, %v308
    %v324 = vpack.c.b16 %v311, %v310
    %v325 = vpack.c.b16 %v313, %v312
    %v326 = vpack.c.b16 %v315, %v314
    %v327 = vpack.c.b16 %v317, %v316
    %v328 = vpack.c.b16 %v319, %v318
    %v329 = vpack.c.b16 %v321, %v320
    %338 = vmatprep.subr.bf16.mxu0 0
    %339 = vmatpush1.bf16.msra.mxu0 %v329
    %340 = vmatprep.subr.bf16.mxu0 0
    %341 = vmatpush1.bf16.msra.mxu0 %v328
    %342 = vmatprep.subr.bf16.mxu0 0
    %343 = vmatpush1.bf16.msra.mxu0 %v327
    %344 = vmatprep.subr.bf16.mxu0 0
    %345 = vmatpush1.bf16.msra.mxu0 %v326
    %346 = vmatprep.subr.bf16.mxu0 0
    %347 = vmatpush1.bf16.msra.mxu0 %v325
    %348 = vmatprep.subr.bf16.mxu0 0
    %349 = vmatpush1.bf16.msra.mxu0 %v324
    %350 = vmatprep.subr.bf16.mxu0 0
    %351 = vmatpush1.bf16.msra.mxu0 %v323
    %352 = vmatprep.subr.bf16.mxu0 0
    %353 = vmatpush1.bf16.msra.mxu0 %v322
    %354 = vmatprep.subr.bf16.mxu0 0
    %355 = vmatpush2.bf16.msra.mxu0 0
    %356 = vmatprep.subr.bf16.mxu0 0
    %357 = vmatpush2.bf16.msra.mxu0 0
    %358 = vmatprep.subr.bf16.mxu0 0
    %359 = vmatpush2.bf16.msra.mxu0 0
    %360 = vmatprep.subr.bf16.mxu0 0
    %361 = vmatpush2.bf16.msra.mxu0 0
    %362 = vmatprep.subr.bf16.mxu0 0
    %363 = vmatpush2.bf16.msra.mxu0 0
    %364 = vmatprep.subr.bf16.mxu0 0
    %365 = vmatpush2.bf16.msra.mxu0 0
    %366 = vmatprep.subr.bf16.mxu0 0
    %367 = vmatpush2.bf16.msra.mxu0 0
    %368 = vmatprep.subr.bf16.mxu0 0
    %369 = vmatpush2.bf16.msra.mxu0 0
    %370 = vmatprep.mubr.bf16.mxu0 0
    %371 = vmatmul.mubr.bf16.gmra.mxu0 %v288
    %v372 = vpop.f32.mrf.mxu0
    %v373 = vadd.f32 0.0, %v372
    %v374 = vpop.f32.mrf.mxu0
    %v375 = vpop.f32.mrf.mxu0
    %v376 = vadd.f32 0.0, %v375
    %v377 = vpop.f32.mrf.mxu0
    %378 = vdwg.mxu0
    %v379 = vadd.f32 %v373, %v376
    %v380 = vrot.slane %v379, 4
    %v381 = vadd.f32 %v379, %v380
    %v382 = vrot.slane %v381, 2
    %v383 = vadd.f32 %v381, %v382
    %v384 = vrot.slane %v383, 1
    %v385 = vadd.f32 %v383, %v384
    %v386 = vmul.f32 %v385, 0.125
    %v387 = vsub.f32 %v373, %v386
    %v388 = vsub.f32 %v376, %v386
    %v389 = vmul.f32 %v387, %v93
    %v390 = vmul.f32 %v388, %v94
    %v391 = vmul.f32 %v389, %v389
    %v392 = vmul.f32 %v390, %v390
    %v393 = vadd.f32 %v391, %v392
    %v394 = vrot.slane %v393, 4
    %v395 = vadd.f32 %v393, %v394
    %v396 = vrot.slane %v395, 2
    %v397 = vadd.f32 %v395, %v396
    %v398 = vrot.slane %v397, 1
    %v399 = vadd.f32 %v397, %v398
    %v400 = vmul.f32 %v399, 0.125
    %v401 = vadd.f32 %v400, 1e-05
    %v402 = vrsqrt.pop %v401
    %v403 = vld [vmem:[%s82] sm:$0x3]
    %v404 = vmul.f32 %v402, %v403
    %v405 = vlaneseq
    %v406 = vshrl.u32 %v405, 7
    %v407 = vsub.s32 0, %v406
    %v408 = vrot.slane %v404, %v407
    %v409 = vmul.f32 %v387, %v408
    %v410 = vmul.f32 %v388, %v408
    %v411 = vlaneseq
    %v412 = vshrl.u32 %v411, 7
    %v413 = vsub.s32 1, %v412
    %v414 = vrot.slane %v403, %v413
    %v415 = vadd.f32 %v409, %v414
    %v416 = vadd.f32 %v410, %v414
    %v417 = vmul.f32 %v415, 0.01
    %v418 = vmul.f32 %v416, 0.01
    %v419 = vmax.f32 %v415, %v417
    %v420 = vmax.f32 %v416, %v418
    %421 = vst [vmem:[#allocation9] sm:$0xff] %v419
    %422 = vst [vmem:[#allocation9 + $0x8] sm:$0xff] %v420
    // Predicated region
    $region38: #{tpu_custom_call.1} parent=1 // pred_check
      _
    $region39: #{tpu_custom_call.1} parent=1 // pred_check_branch
      %424 = sbr.rel (0) target = $region41
    $region40: #{tpu_custom_call.1} parent=1 // pred_region
      %s425 = sadd.s32 0, 0
      %s427 = ssub.s32 256, 256
      %428 = vsyncadd [#allocation5], %s427
      %s429 = smul.addr %s425, 128
      %s430 = scalar_lea.hbm %s5, %s429
      %s431 = sshll.u32 [#allocation9], 4
      %s432 = int_to_ptr.vmem [resolvable:$true] %s431
      %437 = dma.vmem_to_hbm [thread:$0]  %s432, 256, %s430, [#allocation5], 128, 128, 8
    $region41: #{tpu_custom_call.1} parent=1 // pred_fallthru
      _
    // Predicated region
    $region42: #{tpu_custom_call.1} parent=1 // pred_check
      _
    $region43: #{tpu_custom_call.1} parent=1 // pred_check_branch
      %439 = sbr.rel (0) target = $region45
    $region44: #{tpu_custom_call.1} parent=1 // pred_region
      %440 = dma.done [#allocation5], 256
    $region45: #{tpu_custom_call.1} parent=1 // pred_fallthru
      _
    %441 = vsyncpa [#allocation4], 1
    %442 = vsyncpa [#allocation7], 1
    %443 = vsyncpa [#allocation5], 1

// kernel: tpu_custom_call.1
$region0: #{tpu_custom_call.1}
  #allocation0 [shape = 'u32[]', space=smem, size = 0x4, offset = 0x4, fixed_abs, tag = 'smem constant byte address 0x4 - core index']
  #allocation1 [shape = 'u32[144,128]{1,0:T(1,128)}', space=vmem, size = 0x12000, scoped, tag = 'internal scratch']
  #allocation2 [shape = 'bf16[16,128]{1,0:T(8,128)(2,1)}', space=vmem, size = 0x1000, scoped, tag = 'scratch operand']
  %s0 = inlined_call_operand.hbm [shape: bf16[16,128], index: 0, kind: input, shape index: {}]
  %s1 = inlined_call_operand.hbm [shape: bf16[128,128], index: 1, kind: input, shape index: {}]
  %s2 = inlined_call_operand.vmem [shape: f32[2,128], index: 2, kind: input, shape index: {}]
  %s3 = inlined_call_operand.hbm [shape: bf16[1,128,128], index: 3, kind: input, shape index: {}]
  %s4 = inlined_call_operand.vmem [shape: f32[2,128], index: 4, kind: input, shape index: {}]
  %s5 = inlined_call_operand.hbm [shape: f32[16,128], index: 5, kind: output, shape index: {}]
  %s6 = sld [smem:[#allocation0]]
  $region46: #{tpu_custom_call.1} parent=0
    _
  %s8 = ssub.s32 1, %s6
  %s9 = scalar_select 0, %s8, %s6
  $region1: #{tpu_custom_call.1} parent=0
    #allocation3 [shape = 'u8[4096]{0}', space=vmem, size = 0x1000, scoped, tag = 'input window, operand 0, single buffered']
    #allocation4 [shape = 's32[1]{0}', space=sflag, size = 0x4, scoped, tag = 'scoped memory for tpu_custom_call.1']
    #allocation5 [shape = 's32[1]{0}', space=sflag, size = 0x4, scoped, tag = 'scoped memory for tpu_custom_call.1']
    #allocation6 [shape = 'u8[32768]{0}', space=vmem, size = 0x8000, scoped, tag = 'input window, operand 1, single buffered']
    #allocation7 [shape = 's32[1]{0}', space=sflag, size = 0x4, scoped, tag = 'scoped memory for tpu_custom_call.1']
    #allocation8 [shape = 'u8[32768]{0}', space=vmem, size = 0x8000, scoped, tag = 'input window, operand 3, single buffered']
    #allocation9 [shape = 'u8[8192]{0}', space=vmem, size = 0x2000, scoped, tag = 'output window, operand 0, single buffered']
    %10 = vsyncpa [#allocation4], 0
    %11 = vsyncpa [#allocation7], 0
    %12 = vsyncpa [#allocation5], 0
    // Predicated region
    $region2: #{tpu_custom_call.1} parent=1 // pred_check
      _
    $region3: #{tpu_custom_call.1} parent=1 // pred_check_branch
      %14 = sbr.rel (0) target = $region5
    $region4: #{tpu_custom_call.1} parent=1 // pred_region
      %s16 = ssub.s32 128, 128
      %17 = vsyncadd [#allocation4], %s16
      %s18 = sshll.u32 [#allocation3], 4
      %s19 = int_to_ptr.vmem [resolvable:$true] %s18
      %24 = dma.hbm_to_vmem [thread:$0]  %s0, 128, %s19, [#allocation4], 64, 64, 4
    $region5: #{tpu_custom_call.1} parent=1 // pred_fallthru
      _
    // Predicated region
    $region6: #{tpu_custom_call.1} parent=1 // pred_check
      _
    $region7: #{tpu_custom_call.1} parent=1 // pred_check_branch
      %26 = sbr.rel (0) target = $region9
    $region8: #{tpu_custom_call.1} parent=1 // pred_region
      %s28 = ssub.s32 1024, 1024
      %29 = vsyncadd [#allocation7], %s28
      %s30 = sshll.u32 [#allocation6], 4
      %s31 = int_to_ptr.vmem [resolvable:$true] %s30
      %36 = dma.hbm_to_vmem [thread:$0]  %s1, 1024, %s31, [#allocation7], 64, 64, 4
    $region9: #{tpu_custom_call.1} parent=1 // pred_fallthru
      _
    // Predicated region
    $region10: #{tpu_custom_call.1} parent=1 // pred_check
      _
    $region11: #{tpu_custom_call.1} parent=1 // pred_check_branch
      %38 = sbr.rel (0) target = $region13
    $region12: #{tpu_custom_call.1} parent=1 // pred_region
      _
    $region13: #{tpu_custom_call.1} parent=1 // pred_fallthru
      _
    // Predicated region
    $region14: #{tpu_custom_call.1} parent=1 // pred_check
      _
    $region15: #{tpu_custom_call.1} parent=1 // pred_check_branch
      %40 = sbr.rel (0) target = $region17
    $region16: #{tpu_custom_call.1} parent=1 // pred_region
      %s41 = sadd.s32 0, 0
      %s43 = ssub.s32 1024, 1024
      %44 = vsyncadd [#allocation7], %s43
      %s45 = smul.addr %s41, 16
      %s46 = smul.addr %s45, 64
      %s47 = scalar_lea.hbm %s3, %s46
      %s48 = sshll.u32 [#allocation8], 4
      %s49 = int_to_ptr.vmem [resolvable:$true] %s48
      %54 = dma.hbm_to_vmem [thread:$0]  %s47, 1024, %s49, [#allocation7], 64, 64, 4
    $region17: #{tpu_custom_call.1} parent=1 // pred_fallthru
      _
    // Predicated region
    $region18: #{tpu_custom_call.1} parent=1 // pred_check
      _
    $region19: #{tpu_custom_call.1} parent=1 // pred_check_branch
      %56 = sbr.rel (0) target = $region21
    $region20: #{tpu_custom_call.1} parent=1 // pred_region
      %s57 = sadd.s32 0, 0
      %p58 = scmp.lt.s32.totalorder %s57, 0
      %s59 = scalar_select %p58, %s57, 0
      %s60 = smul.addr %s59, 2
      %s61 = scalar_lea.vmem %s4, %s60
      %s62 = sadd.s32 0, 0
    $region21: #{tpu_custom_call.1} parent=1 // pred_fallthru
      _
    // Predicated region
    $region22: #{tpu_custom_call.1} parent=1 // pred_check
      _
    $region23: #{tpu_custom_call.1} parent=1 // pred_check_branch
      %64 = sbr.rel (0) target = $region25
    $region24: #{tpu_custom_call.1} parent=1 // pred_region
      %65 = dma.done [#allocation4], 128
    $region25: #{tpu_custom_call.1} parent=1 // pred_fallthru
      _
    // Predicated region
    $region26: #{tpu_custom_call.1} parent=1 // pred_check
      _
    $region27: #{tpu_custom_call.1} parent=1 // pred_check_branch
      %67 = sbr.rel (0) target = $region29
    $region28: #{tpu_custom_call.1} parent=1 // pred_region
      %68 = dma.done [#allocation7], 1024
    $region29: #{tpu_custom_call.1} parent=1 // pred_fallthru
      _
    // Predicated region
    $region30: #{tpu_custom_call.1} parent=1 // pred_check
      _
    $region31: #{tpu_custom_call.1} parent=1 // pred_check_branch
      %70 = sbr.rel (0) target = $region33
    $region32: #{tpu_custom_call.1} parent=1 // pred_region
      %71 = dma.done [#allocation7], 1024
    $region33: #{tpu_custom_call.1} parent=1 // pred_fallthru
      _
    %s72 = sadd.s32 0, 0
    %p73 = scmp.lt.s32.totalorder %s72, 0
    %s74 = scalar_select %p73, %s72, 0
    %s75 = smul.addr %s74, 2
    %s76 = scalar_lea.vmem %s4, %s75
    %s77 = sadd.s32 0, 0
    %s78 = sadd.s32 0, 0
    %p79 = scmp.lt.s32.totalorder %s78, 0
    %s80 = scalar_select %p79, %s78, 0
    %s81 = smul.addr %s80, 2
    %s82 = scalar_lea.vmem %s4, %s81
    %s83 = sadd.s32 0, 0
    %s84 = sadd.s32 0, 0
    %v86 = vlaneseq
    %v87 = vshrl.u32 %v86, 7
    %v88 = vadd.s32 %v87, 8
    %vm89 = vcmp.lt.s32.totalorder %v87, 8
    %vm90 = vcmp.lt.s32.totalorder %v88, 8
    %v91 = vsel %vm89, 1, 0
    %v92 = vsel %vm90, 1, 0
    %v93 = vcvt.s32.f32 %v91
    %v94 = vcvt.s32.f32 %v92
    %p95 = scmp.eq.s32.totalorder 0, 0
    // Predicated region
    $region34: #{tpu_custom_call.1} parent=1 // pred_check
      %p96 = pneg %p95
    $region35: #{tpu_custom_call.1} parent=1 // pred_check_branch
      %98 = sbr.rel (%p96) target = $region37
    $region36: #{tpu_custom_call.1} parent=1 // pred_region
      %v99 = vld [vmem:[#allocation3] sm:$0xf]
      %v100 = vld [vmem:[#allocation3 + $0x4] sm:$0xf]
      %v101 = vld [vmem:[#allocation6] sm:$0xf]
      %v102 = vld [vmem:[#allocation6 + $0x4] sm:$0xf]
      %v103 = vld [vmem:[#allocation6 + $0x8] sm:$0xf]
      %v104 = vld [vmem:[#allocation6 + $0xc] sm:$0xf]
      %v105 = vld [vmem:[#allocation6 + $0x10] sm:$0xf]
      %v106 = vld [vmem:[#allocation6 + $0x14] sm:$0xf]
      %v107 = vld [vmem:[#allocation6 + $0x18] sm:$0xf]
      %v108 = vld [vmem:[#allocation6 + $0x1c] sm:$0xf]
      %v109 = vld [vmem:[#allocation6 + $0x20] sm:$0xf]
      %v110 = vld [vmem:[#allocation6 + $0x24] sm:$0xf]
      %v111 = vld [vmem:[#allocation6 + $0x28] sm:$0xf]
      %v112 = vld [vmem:[#allocation6 + $0x2c] sm:$0xf]
      %v113 = vld [vmem:[#allocation6 + $0x30] sm:$0xf]
      %v114 = vld [vmem:[#allocation6 + $0x34] sm:$0xf]
      %v115 = vld [vmem:[#allocation6 + $0x38] sm:$0xf]
      %v116 = vld [vmem:[#allocation6 + $0x3c] sm:$0xf]
      %v119 = vunpack.c.l.b16 %v99
      %v120 = vunpack.c.l.b16 %v100
      %v121 = vpack.c.b16 %v120, %v119
      %v139 = vunpack.c.l.b16 %v101
      %v140 = vunpack.c.l.b16 %v102
      %v141 = vunpack.c.l.b16 %v103
      %v142 = vunpack.c.l.b16 %v104
      %v143 = vunpack.c.l.b16 %v105
      %v144 = vunpack.c.l.b16 %v106
      %v145 = vunpack.c.l.b16 %v107
      %v146 = vunpack.c.l.b16 %v108
      %v147 = vunpack.c.l.b16 %v109
      %v148 = vunpack.c.l.b16 %v110
      %v149 = vunpack.c.l.b16 %v111
      %v150 = vunpack.c.l.b16 %v112
      %v151 = vunpack.c.l.b16 %v113
      %v152 = vunpack.c.l.b16 %v114
      %v153 = vunpack.c.l.b16 %v115
      %v154 = vunpack.c.l.b16 %v116
      %v155 = vpack.c.b16 %v140, %v139
      %v156 = vpack.c.b16 %v142, %v141
      %v157 = vpack.c.b16 %v144, %v143
      %v158 = vpack.c.b16 %v146, %v145
      %v159 = vpack.c.b16 %v148, %v147
      %v160 = vpack.c.b16 %v150, %v149
      %v161 = vpack.c.b16 %v152, %v151
      %v162 = vpack.c.b16 %v154, %v153
      %171 = vmatprep.subr.bf16.mxu0 0
      %172 = vmatpush1.bf16.msra.mxu0 %v162
      %173 = vmatprep.subr.bf16.mxu0 0
      %174 = vmatpush1.bf16.msra.mxu0 %v161
      %175 = vmatprep.subr.bf16.mxu0 0
      %176 = vmatpush1.bf16.msra.mxu0 %v160
      %177 = vmatprep.subr.bf16.mxu0 0
      %178 = vmatpush1.bf16.msra.mxu0 %v159
      %179 = vmatprep.subr.bf16.mxu0 0
      %180 = vmatpush1.bf16.msra.mxu0 %v158
      %181 = vmatprep.subr.bf16.mxu0 0
      %182 = vmatpush1.bf16.msra.mxu0 %v157
      %183 = vmatprep.subr.bf16.mxu0 0
      %184 = vmatpush1.bf16.msra.mxu0 %v156
      %185 = vmatprep.subr.bf16.mxu0 0
      %186 = vmatpush1.bf16.msra.mxu0 %v155
      %187 = vmatprep.subr.bf16.mxu0 0
      %188 = vmatpush2.bf16.msra.mxu0 0
      %189 = vmatprep.subr.bf16.mxu0 0
      %190 = vmatpush2.bf16.msra.mxu0 0
      %191 = vmatprep.subr.bf16.mxu0 0
      %192 = vmatpush2.bf16.msra.mxu0 0
      %193 = vmatprep.subr.bf16.mxu0 0
      %194 = vmatpush2.bf16.msra.mxu0 0
      %195 = vmatprep.subr.bf16.mxu0 0
      %196 = vmatpush2.bf16.msra.mxu0 0
      %197 = vmatprep.subr.bf16.mxu0 0
      %198 = vmatpush2.bf16.msra.mxu0 0
      %199 = vmatprep.subr.bf16.mxu0 0
      %200 = vmatpush2.bf16.msra.mxu0 0
      %201 = vmatprep.subr.bf16.mxu0 0
      %202 = vmatpush2.bf16.msra.mxu0 0
      %203 = vmatprep.mubr.bf16.mxu0 0
      %204 = vmatmul.mubr.bf16.gmra.mxu0 %v121
      %v205 = vpop.f32.mrf.mxu0
      %v206 = vadd.f32 0.0, %v205
      %v207 = vpop.f32.mrf.mxu0
      %v208 = vpop.f32.mrf.mxu0
      %v209 = vadd.f32 0.0, %v208
      %v210 = vpop.f32.mrf.mxu0
      %211 = vdwg.mxu0
      %v212 = vadd.f32 %v206, %v209
      %v213 = vrot.slane %v212, 4
      %v214 = vadd.f32 %v212, %v213
      %v215 = vrot.slane %v214, 2
      %v216 = vadd.f32 %v214, %v215
      %v217 = vrot.slane %v216, 1
      %v218 = vadd.f32 %v216, %v217
      %v219 = vmul.f32 %v218, 0.125
      %v220 = vsub.f32 %v206, %v219
      %v221 = vsub.f32 %v209, %v219
      %v222 = vmul.f32 %v220, %v93
      %v223 = vmul.f32 %v221, %v94
      %v224 = vmul.f32 %v222, %v222
      %v225 = vmul.f32 %v223, %v223
      %v226 = vadd.f32 %v224, %v225
      %v227 = vrot.slane %v226, 4
      %v228 = vadd.f32 %v226, %v227
      %v229 = vrot.slane %v228, 2
      %v230 = vadd.f32 %v228, %v229
      %v231 = vrot.slane %v230, 1
      %v232 = vadd.f32 %v230, %v231
      %v233 = vmul.f32 %v232, 0.125
      %v234 = vadd.f32 %v233, 1e-05
      %v235 = vrsqrt.pop %v234
      %v236 = vld [vmem:[%s2] sm:$0x3]
      %v237 = vmul.f32 %v235, %v236
      %v238 = vlaneseq
      %v239 = vshrl.u32 %v238, 7
      %v240 = vsub.s32 0, %v239
      %v241 = vrot.slane %v237, %v240
      %v242 = vmul.f32 %v222, %v241
      %v243 = vmul.f32 %v223, %v241
      %v244 = vlaneseq
      %v245 = vshrl.u32 %v244, 7
      %v246 = vsub.s32 1, %v245
      %v247 = vrot.slane %v236, %v246
      %v248 = vadd.f32 %v242, %v247
      %v249 = vadd.f32 %v243, %v247
      %v250 = vmul.f32 %v248, 0.01
      %v251 = vmul.f32 %v249, 0.01
      %v252 = vmax.f32 %v248, %v250
      %v253 = vmax.f32 %v249, %v251
      %v254 = vmul.f32 %v252, %v93
      %v255 = vmul.f32 %v253, %v94
      %v256 = vpack.c.bf16 %v255, %v254
      %v258 = vunpack.c.l.b16 %v256
      %v259 = vunpack.c.h.b16 %v256
      %v260 = vpack.c.b16 %v258, %v258
      %v261 = vpack.c.b16 %v259, %v259
      %264 = vst [vmem:[#allocation2] sm:$0xf] %v260
      %265 = vst [vmem:[#allocation2 + $0x4] sm:$0xf] %v261
    $region37: #{tpu_custom_call.1} parent=1 // pred_fallthru
      _
    %v266 = vld [vmem:[#allocation2] sm:$0xf]
    %v267 = vld [vmem:[#allocation2 + $0x4] sm:$0xf]
    %v268 = vld [vmem:[#allocation8] sm:$0xf]
    %v269 = vld [vmem:[#allocation8 + $0x4] sm:$0xf]
    %v270 = vld [vmem:[#allocation8 + $0x8] sm:$0xf]
    %v271 = vld [vmem:[#allocation8 + $0xc] sm:$0xf]
    %v272 = vld [vmem:[#allocation8 + $0x10] sm:$0xf]
    %v273 = vld [vmem:[#allocation8 + $0x14] sm:$0xf]
    %v274 = vld [vmem:[#allocation8 + $0x18] sm:$0xf]
    %v275 = vld [vmem:[#allocation8 + $0x1c] sm:$0xf]
    %v276 = vld [vmem:[#allocation8 + $0x20] sm:$0xf]
    %v277 = vld [vmem:[#allocation8 + $0x24] sm:$0xf]
    %v278 = vld [vmem:[#allocation8 + $0x28] sm:$0xf]
    %v279 = vld [vmem:[#allocation8 + $0x2c] sm:$0xf]
    %v280 = vld [vmem:[#allocation8 + $0x30] sm:$0xf]
    %v281 = vld [vmem:[#allocation8 + $0x34] sm:$0xf]
    %v282 = vld [vmem:[#allocation8 + $0x38] sm:$0xf]
    %v283 = vld [vmem:[#allocation8 + $0x3c] sm:$0xf]
    %v286 = vunpack.c.l.b16 %v266
    %v287 = vunpack.c.l.b16 %v267
    %v288 = vpack.c.b16 %v287, %v286
    %v306 = vunpack.c.l.b16 %v268
    %v307 = vunpack.c.l.b16 %v269
    %v308 = vunpack.c.l.b16 %v270
    %v309 = vunpack.c.l.b16 %v271
    %v310 = vunpack.c.l.b16 %v272
    %v311 = vunpack.c.l.b16 %v273
    %v312 = vunpack.c.l.b16 %v274
    %v313 = vunpack.c.l.b16 %v275
    %v314 = vunpack.c.l.b16 %v276
    %v315 = vunpack.c.l.b16 %v277
    %v316 = vunpack.c.l.b16 %v278
    %v317 = vunpack.c.l.b16 %v279
    %v318 = vunpack.c.l.b16 %v280
    %v319 = vunpack.c.l.b16 %v281
    %v320 = vunpack.c.l.b16 %v282
    %v321 = vunpack.c.l.b16 %v283
    %v322 = vpack.c.b16 %v307, %v306
    %v323 = vpack.c.b16 %v309, %v308
    %v324 = vpack.c.b16 %v311, %v310
    %v325 = vpack.c.b16 %v313, %v312
    %v326 = vpack.c.b16 %v315, %v314
    %v327 = vpack.c.b16 %v317, %v316
    %v328 = vpack.c.b16 %v319, %v318
    %v329 = vpack.c.b16 %v321, %v320
    %338 = vmatprep.subr.bf16.mxu0 0
    %339 = vmatpush1.bf16.msra.mxu0 %v329
    %340 = vmatprep.subr.bf16.mxu0 0
    %341 = vmatpush1.bf16.msra.mxu0 %v328
    %342 = vmatprep.subr.bf16.mxu0 0
    %343 = vmatpush1.bf16.msra.mxu0 %v327
    %344 = vmatprep.subr.bf16.mxu0 0
    %345 = vmatpush1.bf16.msra.mxu0 %v326
    %346 = vmatprep.subr.bf16.mxu0 0
    %347 = vmatpush1.bf16.msra.mxu0 %v325
    %348 = vmatprep.subr.bf16.mxu0 0
    %349 = vmatpush1.bf16.msra.mxu0 %v324
    %350 = vmatprep.subr.bf16.mxu0 0
    %351 = vmatpush1.bf16.msra.mxu0 %v323
    %352 = vmatprep.subr.bf16.mxu0 0
    %353 = vmatpush1.bf16.msra.mxu0 %v322
    %354 = vmatprep.subr.bf16.mxu0 0
    %355 = vmatpush2.bf16.msra.mxu0 0
    %356 = vmatprep.subr.bf16.mxu0 0
    %357 = vmatpush2.bf16.msra.mxu0 0
    %358 = vmatprep.subr.bf16.mxu0 0
    %359 = vmatpush2.bf16.msra.mxu0 0
    %360 = vmatprep.subr.bf16.mxu0 0
    %361 = vmatpush2.bf16.msra.mxu0 0
    %362 = vmatprep.subr.bf16.mxu0 0
    %363 = vmatpush2.bf16.msra.mxu0 0
    %364 = vmatprep.subr.bf16.mxu0 0
    %365 = vmatpush2.bf16.msra.mxu0 0
    %366 = vmatprep.subr.bf16.mxu0 0
    %367 = vmatpush2.bf16.msra.mxu0 0
    %368 = vmatprep.subr.bf16.mxu0 0
    %369 = vmatpush2.bf16.msra.mxu0 0
    %370 = vmatprep.mubr.bf16.mxu0 0
    %371 = vmatmul.mubr.bf16.gmra.mxu0 %v288
    %v372 = vpop.f32.mrf.mxu0
    %v373 = vadd.f32 0.0, %v372
    %v374 = vpop.f32.mrf.mxu0
    %v375 = vpop.f32.mrf.mxu0
    %v376 = vadd.f32 0.0, %v375
    %v377 = vpop.f32.mrf.mxu0
    %378 = vdwg.mxu0
    %v379 = vadd.f32 %v373, %v376
    %v380 = vrot.slane %v379, 4
    %v381 = vadd.f32 %v379, %v380
    %v382 = vrot.slane %v381, 2
    %v383 = vadd.f32 %v381, %v382
    %v384 = vrot.slane %v383, 1
    %v385 = vadd.f32 %v383, %v384
    %v386 = vmul.f32 %v385, 0.125
    %v387 = vsub.f32 %v373, %v386
    %v388 = vsub.f32 %v376, %v386
    %v389 = vmul.f32 %v387, %v93
    %v390 = vmul.f32 %v388, %v94
    %v391 = vmul.f32 %v389, %v389
    %v392 = vmul.f32 %v390, %v390
    %v393 = vadd.f32 %v391, %v392
    %v394 = vrot.slane %v393, 4
    %v395 = vadd.f32 %v393, %v394
    %v396 = vrot.slane %v395, 2
    %v397 = vadd.f32 %v395, %v396
    %v398 = vrot.slane %v397, 1
    %v399 = vadd.f32 %v397, %v398
    %v400 = vmul.f32 %v399, 0.125
    %v401 = vadd.f32 %v400, 1e-05
    %v402 = vrsqrt.pop %v401
    %v403 = vld [vmem:[%s82] sm:$0x3]
    %v404 = vmul.f32 %v402, %v403
    %v405 = vlaneseq
    %v406 = vshrl.u32 %v405, 7
    %v407 = vsub.s32 0, %v406
    %v408 = vrot.slane %v404, %v407
    %v409 = vmul.f32 %v387, %v408
    %v410 = vmul.f32 %v388, %v408
    %v411 = vlaneseq
    %v412 = vshrl.u32 %v411, 7
    %v413 = vsub.s32 1, %v412
    %v414 = vrot.slane %v403, %v413
    %v415 = vadd.f32 %v409, %v414
    %v416 = vadd.f32 %v410, %v414
    %v417 = vmul.f32 %v415, 0.01
    %v418 = vmul.f32 %v416, 0.01
    %v419 = vmax.f32 %v415, %v417
    %v420 = vmax.f32 %v416, %v418
    %421 = vst [vmem:[#allocation9] sm:$0xff] %v419
    %422 = vst [vmem:[#allocation9 + $0x8] sm:$0xff] %v420
    // Predicated region
    $region38: #{tpu_custom_call.1} parent=1 // pred_check
      _
    $region39: #{tpu_custom_call.1} parent=1 // pred_check_branch
      %424 = sbr.rel (0) target = $region41
    $region40: #{tpu_custom_call.1} parent=1 // pred_region
      %s425 = sadd.s32 0, 0
      %s427 = ssub.s32 256, 256
      %428 = vsyncadd [#allocation5], %s427
      %s429 = smul.addr %s425, 128
      %s430 = scalar_lea.hbm %s5, %s429
      %s431 = sshll.u32 [#allocation9], 4
      %s432 = int_to_ptr.vmem [resolvable:$true] %s431
      %437 = dma.vmem_to_hbm [thread:$0]  %s432, 256, %s430, [#allocation5], 128, 128, 8
    $region41: #{tpu_custom_call.1} parent=1 // pred_fallthru
      _
    // Predicated region
    $region42: #{tpu_custom_call.1} parent=1 // pred_check
      _
    $region43: #{tpu_custom_call.1} parent=1 // pred_check_branch
      %439 = sbr.rel (0) target = $region45
    $region44: #{tpu_custom_call.1} parent=1 // pred_region
      %440 = dma.done [#allocation5], 256
    $region45: #{tpu_custom_call.1} parent=1 // pred_fallthru
      _
    %441 = vsyncpa [#allocation4], 1
    %442 = vsyncpa [#allocation7], 1
    %443 = vsyncpa [#allocation5], 1

</llo_original>
